<compile_context>
chip_gen: v7x
topology: tpu7x:2x2x1
jax: 0.10.0
libtpu: 0.0.40
codegen_flags: <defaults>
</compile_context>

<pallas_src>
import functools

import jax
import jax.numpy as jnp
from jax.experimental import pallas as pl
from jax.experimental.pallas import tpu as pltpu

CLAMP_LOGVAR_MIN = -10.0
H_DIM = 32
LANE = 128
SUBLANE = 8


def _round_up(x, m):
    return ((x + m - 1) // m) * m


def _decoder_kernel(saz_ref, w1_ref, b1_ref, w2_ref, b2_ref, floor_ref, out_ref):
    # One batch tile per grid step; weights/biases/floor are VMEM-resident.
    x = saz_ref[...]                                           # (TB, saz_dim)

    # Layer 1: Linear + ReLU (MXU matmul, VPU max).
    h = jnp.dot(x, w1_ref[...], preferred_element_type=jnp.float32)
    h = jnp.maximum(h + b1_ref[...], 0.0)                      # (TB, H_DIM)

    # Layer 2: Linear into a lane-dense (padded to 128) output, then apply the
    # clamp as a single max against a per-column floor:
    #   mu columns     -> floor = -inf  (unchanged)
    #   logvar columns -> floor = -10   (torch.clamp(min=-10))
    y = jnp.dot(h, w2_ref[...], preferred_element_type=jnp.float32)
    y = jnp.maximum(y + b2_ref[...], floor_ref[...])           # (TB, out_pad)

    out_ref[...] = y.astype(out_ref.dtype)


def decoder_forward(saz, w1, b1, w2, b2, *, s_dim, block_b=512):
    """saz: (B, saz_dim) f32 -> (B, 2*s_dim) f32."""
    B, saz_dim = saz.shape
    h_dim = w1.shape[1]
    out_dim = 2 * s_dim
    out_pad = _round_up(out_dim, LANE)

    # Lane-dense output: zero-pad second-layer output features to 128 lanes so
    # every output store is an unmasked full-lane vst; slice back in wrapper.
    w2p = jnp.pad(w2, ((0, 0), (0, out_pad - out_dim)))
    b2p = jnp.pad(b2, ((0, 0), (0, out_pad - out_dim)))

    # Trace-time per-column clamp floor (padded columns get -10; they hold
    # exact zeros and are sliced away, so the value is irrelevant).
    floor = jnp.concatenate(
        [jnp.full((1, s_dim), -jnp.inf, jnp.float32),
         jnp.full((1, out_pad - s_dim), CLAMP_LOGVAR_MIN, jnp.float32)],
        axis=1)

    # Batch tile: sublane-aligned, capped so double-buffered tiles stay tiny
    # (TB*(saz_dim+out_pad)*4B*2 buffers ~= 0.5 MiB at TB=512, out_pad=128),
    # safe on v7x's 64 MiB VMEM and trivially so on v5e/v6e.
    tb = min(_round_up(B, SUBLANE), block_b)
    grid = (pl.cdiv(B, tb),)

    out_padded = pl.pallas_call(
        _decoder_kernel,
        out_shape=jax.ShapeDtypeStruct((B, out_pad), jnp.float32),
        grid=grid,
        in_specs=[
            pl.BlockSpec((tb, saz_dim), lambda i: (i, 0)),     # batch-tiled
            pl.BlockSpec((saz_dim, h_dim), lambda i: (0, 0)),  # resident
            pl.BlockSpec((1, h_dim), lambda i: (0, 0)),        # resident
            pl.BlockSpec((h_dim, out_pad), lambda i: (0, 0)),  # resident
            pl.BlockSpec((1, out_pad), lambda i: (0, 0)),      # resident
            pl.BlockSpec((1, out_pad), lambda i: (0, 0)),      # resident
        ],
        out_specs=pl.BlockSpec((tb, out_pad), lambda i: (i, 0)),
        compiler_params=pltpu.CompilerParams(
            dimension_semantics=("parallel",)),                # 2 TCs on v7x
    )(saz, w1, b1, w2p, b2p, floor)

    return out_padded[:, :out_dim]


def init_decoder_params(key, s_dim, a_dim, z_dim):
    """Deterministic init mimicking nn.Linear default (uniform +-1/sqrt(fan_in))."""
    saz_dim = s_dim + a_dim + z_dim
    k1, k2, k3, k4 = jax.random.split(key, 4)
    bound1 = 1.0 / jnp.sqrt(saz_dim)
    bound2 = 1.0 / jnp.sqrt(H_DIM)
    # stored as (in, out): transpose of PyTorch's (out, in) weight layout
    w1 = jax.random.uniform(k1, (saz_dim, H_DIM), jnp.float32, -bound1, bound1)
    b1 = jax.random.uniform(k2, (1, H_DIM), jnp.float32, -bound1, bound1)
    w2 = jax.random.uniform(k3, (H_DIM, 2 * s_dim), jnp.float32, -bound2, bound2)
    b2 = jax.random.uniform(k4, (1, 2 * s_dim), jnp.float32, -bound2, bound2)
    return w1, b1, w2, b2


def decoder_reference(saz, w1, b1, w2, b2, *, s_dim):
    """Pure-JAX reference for correctness check."""
    h = jnp.maximum(saz @ w1 + b1, 0.0)
    y = h @ w2 + b2
    mu = y[:, :s_dim]
    logvar = jnp.maximum(y[:, s_dim:], CLAMP_LOGVAR_MIN)
    return jnp.concatenate([mu, logvar], axis=1)


if __name__ == "__main__":
    s_dim, a_dim, z_dim = 4, 2, 2   # saz_dim = 8
    batch = 8

    key = jax.random.PRNGKey(0)
    k_params, k_x = jax.random.split(key)
    w1, b1, w2, b2 = init_decoder_params(k_params, s_dim, a_dim, z_dim)
    saz = jax.random.normal(k_x, (batch, s_dim + a_dim + z_dim), jnp.float32)

    out = decoder_forward(saz, w1, b1, w2, b2, s_dim=s_dim)
    out = jax.block_until_ready(out)

    ref = decoder_reference(saz, w1, b1, w2, b2, s_dim=s_dim)
    assert out.shape == (batch, 2 * s_dim)
    assert jnp.allclose(out, ref, atol=1e-5, rtol=1e-5)

    print("KERNEL_OK")
</pallas_src>

<mosaic_0001>
module attributes {stable_mosaic.version = 11 : i64} {
  func.func @_decoder_kernel(%arg0: i32, %arg1: memref<8x8xf32, #tpu.memory_space<vmem>>, %arg2: memref<8x32xf32, #tpu.memory_space<vmem>>, %arg3: memref<1x32xf32, #tpu.memory_space<vmem>>, %arg4: memref<32x128xf32, #tpu.memory_space<vmem>>, %arg5: memref<1x128xf32, #tpu.memory_space<vmem>>, %arg6: memref<1x128xf32, #tpu.memory_space<vmem>>, %arg7: memref<8x128xf32, #tpu.memory_space<vmem>>) attributes {dimension_semantics = [#tpu.dimension_semantics<parallel>], iteration_bounds = array<i64: 1>, scalar_prefetch = 0 : i64, scratch_operands = 0 : i64, tpu.core_type = #tpu.core_type<tc>, window_params = [{transform_indices = @transform_0, window_bounds = array<i64: 8, 8>}, {pipeline_mode = #tpu.pipeline_mode<synchronous>, transform_indices = @transform_1, window_bounds = array<i64: 8, 32>}, {pipeline_mode = #tpu.pipeline_mode<synchronous>, transform_indices = @transform_2, window_bounds = array<i64: 1, 32>}, {pipeline_mode = #tpu.pipeline_mode<synchronous>, transform_indices = @transform_3, window_bounds = array<i64: 32, 128>}, {pipeline_mode = #tpu.pipeline_mode<synchronous>, transform_indices = @transform_4, window_bounds = array<i64: 1, 128>}, {pipeline_mode = #tpu.pipeline_mode<synchronous>, transform_indices = @transform_5, window_bounds = array<i64: 1, 128>}, {transform_indices = @transform_6, window_bounds = array<i64: 8, 128>}]} {
    %c0 = arith.constant 0 : index
    %c0_0 = arith.constant 0 : index
    %0 = vector.load %arg1[%c0, %c0_0] : memref<8x8xf32, #tpu.memory_space<vmem>>, vector<8x8xf32>
    %c0_1 = arith.constant 0 : index
    %c0_2 = arith.constant 0 : index
    %1 = vector.load %arg2[%c0_1, %c0_2] : memref<8x32xf32, #tpu.memory_space<vmem>>, vector<8x32xf32>
    %cst = arith.constant dense<0.000000e+00> : vector<8x32xf32>
    %2 = tpu.matmul %0, %1, %cst {dimension_numbers = #tpu.dot_dimension_numbers<[1], [0], [0], [1], [0, 0, 1, 1], [], []>} : vector<8x8xf32>, vector<8x32xf32>, vector<8x32xf32> -> vector<8x32xf32>
    %c0_3 = arith.constant 0 : index
    %c0_4 = arith.constant 0 : index
    %3 = vector.load %arg3[%c0_3, %c0_4] : memref<1x32xf32, #tpu.memory_space<vmem>>, vector<1x32xf32>
    %4 = vector.broadcast %3 : vector<1x32xf32> to vector<8x32xf32>
    %5 = arith.addf %2, %4 : vector<8x32xf32>
    %cst_5 = arith.constant 0.000000e+00 : f32
    %6 = vector.broadcast %cst_5 : f32 to vector<8x32xf32>
    %7 = arith.maximumf %5, %6 : vector<8x32xf32>
    %c0_6 = arith.constant 0 : index
    %c0_7 = arith.constant 0 : index
    %8 = vector.load %arg4[%c0_6, %c0_7] : memref<32x128xf32, #tpu.memory_space<vmem>>, vector<32x128xf32>
    %cst_8 = arith.constant dense<0.000000e+00> : vector<8x128xf32>
    %9 = tpu.matmul %7, %8, %cst_8 {dimension_numbers = #tpu.dot_dimension_numbers<[1], [0], [0], [1], [0, 0, 1, 1], [], []>} : vector<8x32xf32>, vector<32x128xf32>, vector<8x128xf32> -> vector<8x128xf32>
    %c0_9 = arith.constant 0 : index
    %c0_10 = arith.constant 0 : index
    %10 = vector.load %arg5[%c0_9, %c0_10] : memref<1x128xf32, #tpu.memory_space<vmem>>, vector<1x128xf32>
    %11 = vector.broadcast %10 : vector<1x128xf32> to vector<8x128xf32>
    %12 = arith.addf %9, %11 : vector<8x128xf32>
    %c0_11 = arith.constant 0 : index
    %c0_12 = arith.constant 0 : index
    %13 = vector.load %arg6[%c0_11, %c0_12] : memref<1x128xf32, #tpu.memory_space<vmem>>, vector<1x128xf32>
    %14 = vector.broadcast %13 : vector<1x128xf32> to vector<8x128xf32>
    %15 = arith.maximumf %12, %14 : vector<8x128xf32>
    %c0_13 = arith.constant 0 : index
    %c0_14 = arith.constant 0 : index
    %16 = vector.load %arg7[%c0_13, %c0_14] : memref<8x128xf32, #tpu.memory_space<vmem>>, vector<8x128xf32>
    tpu.vector_store %arg7[%c0_13, %c0_14], %15 {strides = array<i32>} : memref<8x128xf32, #tpu.memory_space<vmem>>, vector<8x128xf32>,
    return
  }
  func.func @transform_0(%arg0: i32) -> (i32, i32) {
    %c0_i32 = arith.constant 0 : i32
    %c0_i32_0 = arith.constant 0 : i32
    return %arg0, %c0_i32 : i32, i32
  }
  func.func @transform_1(%arg0: i32) -> (i32, i32) {
    %c0_i32 = arith.constant 0 : i32
    %c0_i32_0 = arith.constant 0 : i32
    %c0_i32_1 = arith.constant 0 : i32
    return %c0_i32, %c0_i32_0 : i32, i32
  }
  func.func @transform_2(%arg0: i32) -> (i32, i32) {
    %c0_i32 = arith.constant 0 : i32
    %c0_i32_0 = arith.constant 0 : i32
    %c0_i32_1 = arith.constant 0 : i32
    return %c0_i32, %c0_i32_0 : i32, i32
  }
  func.func @transform_3(%arg0: i32) -> (i32, i32) {
    %c0_i32 = arith.constant 0 : i32
    %c0_i32_0 = arith.constant 0 : i32
    %c0_i32_1 = arith.constant 0 : i32
    return %c0_i32, %c0_i32_0 : i32, i32
  }
  func.func @transform_4(%arg0: i32) -> (i32, i32) {
    %c0_i32 = arith.constant 0 : i32
    %c0_i32_0 = arith.constant 0 : i32
    %c0_i32_1 = arith.constant 0 : i32
    return %c0_i32, %c0_i32_0 : i32, i32
  }
  func.func @transform_5(%arg0: i32) -> (i32, i32) {
    %c0_i32 = arith.constant 0 : i32
    %c0_i32_0 = arith.constant 0 : i32
    %c0_i32_1 = arith.constant 0 : i32
    return %c0_i32, %c0_i32_0 : i32, i32
  }
  func.func @transform_6(%arg0: i32) -> (i32, i32) {
    %c0_i32 = arith.constant 0 : i32
    %c0_i32_0 = arith.constant 0 : i32
    return %arg0, %c0_i32 : i32, i32
  }
}

</mosaic_0001>

<llo_original>
// kernel: tpu_custom_call.1
$region0: #{tpu_custom_call.1}
  #allocation0 [shape = 'u32[]', space=smem, size = 0x4, offset = 0x4, fixed_abs, tag = 'smem constant byte address 0x4 - core index']
  #allocation1 [shape = 'u32[144,128]{1,0:T(1,128)}', space=vmem, size = 0x12000, scoped, tag = 'internal scratch']
  %s0 = inlined_call_operand.hbm [shape: f32[8,8], index: 0, kind: input, shape index: {}]
  %s1 = inlined_call_operand.hbm [shape: f32[8,32], index: 1, kind: input, shape index: {}]
  %s2 = inlined_call_operand.vmem [shape: f32[1,32], index: 2, kind: input, shape index: {}]
  %s3 = inlined_call_operand.hbm [shape: f32[32,128], index: 3, kind: input, shape index: {}]
  %s4 = inlined_call_operand.vmem [shape: f32[1,128], index: 4, kind: input, shape index: {}]
  %s5 = inlined_call_operand.vmem [shape: f32[1,128], index: 5, kind: input, shape index: {}]
  %s6 = inlined_call_operand.hbm [shape: f32[8,128], index: 6, kind: output, shape index: {}]
  %s7 = sld [smem:[#allocation0]]
  $region46: #{tpu_custom_call.1} parent=0
    _
  %s9 = ssub.s32 1, %s7
  %s10 = scalar_select 0, %s9, %s7
  $region1: #{tpu_custom_call.1} parent=0
    #allocation2 [shape = 'u8[4096]{0}', space=vmem, size = 0x1000, scoped, tag = 'input window, operand 0, single buffered']
    #allocation3 [shape = 's32[1]{0}', space=sflag, size = 0x4, scoped, tag = 'scoped memory for tpu_custom_call.1']
    #allocation4 [shape = 's32[1]{0}', space=sflag, size = 0x4, scoped, tag = 'scoped memory for tpu_custom_call.1']
    #allocation5 [shape = 'u8[4096]{0}', space=vmem, size = 0x1000, scoped, tag = 'input window, operand 1, single buffered']
    #allocation6 [shape = 's32[1]{0}', space=sflag, size = 0x4, scoped, tag = 'scoped memory for tpu_custom_call.1']
    #allocation7 [shape = 'u8[16384]{0}', space=vmem, size = 0x4000, scoped, tag = 'input window, operand 3, single buffered']
    #allocation8 [shape = 'u8[4096]{0}', space=vmem, size = 0x1000, scoped, tag = 'output window, operand 0, single buffered']
    %11 = vsyncpa [#allocation3], 0
    %12 = vsyncpa [#allocation6], 0
    %13 = vsyncpa [#allocation4], 0
    // Predicated region
    $region2: #{tpu_custom_call.1} parent=1 // pred_check
      _
    $region3: #{tpu_custom_call.1} parent=1 // pred_check_branch
      %15 = sbr.rel (0) target = $region5
    $region4: #{tpu_custom_call.1} parent=1 // pred_region
      %s17 = ssub.s32 128, 128
      %18 = vsyncadd [#allocation3], %s17
      %s20 = sshll.u32 [#allocation2], 4
      %s21 = int_to_ptr.vmem [resolvable:$true] %s20
      %23 = dma.hbm_to_vmem [thread:$0]  %s0, 128, %s21, [#allocation3]
    $region5: #{tpu_custom_call.1} parent=1 // pred_fallthru
      _
    // Predicated region
    $region6: #{tpu_custom_call.1} parent=1 // pred_check
      _
    $region7: #{tpu_custom_call.1} parent=1 // pred_check_branch
      %25 = sbr.rel (0) target = $region9
    $region8: #{tpu_custom_call.1} parent=1 // pred_region
      %s27 = ssub.s32 128, 128
      %28 = vsyncadd [#allocation6], %s27
      %s30 = sshll.u32 [#allocation5], 4
      %s31 = int_to_ptr.vmem [resolvable:$true] %s30
      %33 = dma.hbm_to_vmem [thread:$0]  %s1, 128, %s31, [#allocation6]
    $region9: #{tpu_custom_call.1} parent=1 // pred_fallthru
      _
    // Predicated region
    $region10: #{tpu_custom_call.1} parent=1 // pred_check
      _
    $region11: #{tpu_custom_call.1} parent=1 // pred_check_branch
      %35 = sbr.rel (0) target = $region13
    $region12: #{tpu_custom_call.1} parent=1 // pred_region
      _
    $region13: #{tpu_custom_call.1} parent=1 // pred_fallthru
      _
    // Predicated region
    $region14: #{tpu_custom_call.1} parent=1 // pred_check
      _
    $region15: #{tpu_custom_call.1} parent=1 // pred_check_branch
      %37 = sbr.rel (0) target = $region17
    $region16: #{tpu_custom_call.1} parent=1 // pred_region
      %s39 = ssub.s32 512, 512
      %40 = vsyncadd [#allocation6], %s39
      %s41 = sshll.u32 [#allocation7], 4
      %s42 = int_to_ptr.vmem [resolvable:$true] %s41
      %47 = dma.hbm_to_vmem [thread:$0]  %s3, 512, %s42, [#allocation6], 128, 128, 8
    $region17: #{tpu_custom_call.1} parent=1 // pred_fallthru
      _
    // Predicated region
    $region18: #{tpu_custom_call.1} parent=1 // pred_check
      _
    $region19: #{tpu_custom_call.1} parent=1 // pred_check_branch
      %49 = sbr.rel (0) target = $region21
    $region20: #{tpu_custom_call.1} parent=1 // pred_region
      _
    $region21: #{tpu_custom_call.1} parent=1 // pred_fallthru
      _
    // Predicated region
    $region22: #{tpu_custom_call.1} parent=1 // pred_check
      _
    $region23: #{tpu_custom_call.1} parent=1 // pred_check_branch
      %51 = sbr.rel (0) target = $region25
    $region24: #{tpu_custom_call.1} parent=1 // pred_region
      _
    $region25: #{tpu_custom_call.1} parent=1 // pred_fallthru
      _
    // Predicated region
    $region26: #{tpu_custom_call.1} parent=1 // pred_check
      _
    $region27: #{tpu_custom_call.1} parent=1 // pred_check_branch
      %53 = sbr.rel (0) target = $region29
    $region28: #{tpu_custom_call.1} parent=1 // pred_region
      %54 = dma.done [#allocation3], 128
    $region29: #{tpu_custom_call.1} parent=1 // pred_fallthru
      _
    // Predicated region
    $region30: #{tpu_custom_call.1} parent=1 // pred_check
      _
    $region31: #{tpu_custom_call.1} parent=1 // pred_check_branch
      %56 = sbr.rel (0) target = $region33
    $region32: #{tpu_custom_call.1} parent=1 // pred_region
      %57 = dma.done [#allocation6], 128
    $region33: #{tpu_custom_call.1} parent=1 // pred_fallthru
      _
    // Predicated region
    $region34: #{tpu_custom_call.1} parent=1 // pred_check
      _
    $region35: #{tpu_custom_call.1} parent=1 // pred_check_branch
      %59 = sbr.rel (0) target = $region37
    $region36: #{tpu_custom_call.1} parent=1 // pred_region
      %60 = dma.done [#allocation6], 512
    $region37: #{tpu_custom_call.1} parent=1 // pred_fallthru
      _
    %v61 = vld [vmem:[#allocation2] sm:$0xff]
    %v62 = vld [vmem:[#allocation5] sm:$0xff]
    %v63 = vld [vmem:[%s2] sm:$0x1]
    %v65 = vlaneseq
    %v66 = vshrl.u32 %v65, 7
    %v67 = vsub.s32 0, %v66
    %v68 = vrot.slane %v63, %v67
    %vm70 = vcmask 64512
    %v72 = vsel %vm70, %v61, 0
    %74 = vmatprep.subr.mxu0 0.0
    %75 = vmatpush1.msra.mxu0 %v62
    %76 = vmatprep.subr.mxu0 0.0
    %77 = vmatpush1.msra.mxu0 0.0
    %78 = vmatprep.subr.mxu0 0.0
    %79 = vmatpush1.msra.mxu0 0.0
    %80 = vmatprep.subr.mxu0 0.0
    %81 = vmatpush1.msra.mxu0 0.0
    %82 = vmatprep.subr.mxu0 0.0
    %83 = vmatpush1.msra.mxu0 0.0
    %84 = vmatprep.subr.mxu0 0.0
    %85 = vmatpush1.msra.mxu0 0.0
    %86 = vmatprep.subr.mxu0 0.0
    %87 = vmatpush1.msra.mxu0 0.0
    %88 = vmatprep.subr.mxu0 0.0
    %89 = vmatpush1.msra.mxu0 0.0
    %90 = vmatprep.subr.mxu0 0.0
    %91 = vmatpush1.msra.mxu0 0.0
    %92 = vmatprep.subr.mxu0 0.0
    %93 = vmatpush1.msra.mxu0 0.0
    %94 = vmatprep.subr.mxu0 0.0
    %95 = vmatpush1.msra.mxu0 0.0
    %96 = vmatprep.subr.mxu0 0.0
    %97 = vmatpush1.msra.mxu0 0.0
    %98 = vmatprep.subr.mxu0 0.0
    %99 = vmatpush1.msra.mxu0 0.0
    %100 = vmatprep.subr.mxu0 0.0
    %101 = vmatpush1.msra.mxu0 0.0
    %102 = vmatprep.subr.mxu0 0.0
    %103 = vmatpush1.msra.mxu0 0.0
    %104 = vmatprep.subr.mxu0 0.0
    %105 = vmatpush1.msra.mxu0 0.0
    %106 = vmatprep.subr.mxu0 0.0
    %107 = vmatpush1.msra.mxu0 0.0
    %108 = vmatprep.subr.mxu0 0.0
    %109 = vmatpush1.msra.mxu0 0.0
    %110 = vmatprep.subr.mxu0 0.0
    %111 = vmatpush1.msra.mxu0 0.0
    %112 = vmatprep.subr.mxu0 0.0
    %113 = vmatpush1.msra.mxu0 0.0
    %114 = vmatprep.subr.mxu0 0.0
    %115 = vmatpush1.msra.mxu0 0.0
    %116 = vmatprep.subr.mxu0 0.0
    %117 = vmatpush1.msra.mxu0 0.0
    %118 = vmatprep.subr.mxu0 0.0
    %119 = vmatpush1.msra.mxu0 0.0
    %120 = vmatprep.subr.mxu0 0.0
    %121 = vmatpush1.msra.mxu0 0.0
    %122 = vmatprep.subr.mxu0 0.0
    %123 = vmatpush1.msra.mxu0 0.0
    %124 = vmatprep.subr.mxu0 0.0
    %125 = vmatpush1.msra.mxu0 0.0
    %126 = vmatprep.subr.mxu0 0.0
    %127 = vmatpush1.msra.mxu0 0.0
    %128 = vmatprep.subr.mxu0 0.0
    %129 = vmatpush1.msra.mxu0 0.0
    %130 = vmatprep.subr.mxu0 0.0
    %131 = vmatpush1.msra.mxu0 0.0
    %132 = vmatprep.subr.mxu0 0.0
    %133 = vmatpush1.msra.mxu0 0.0
    %134 = vmatprep.subr.mxu0 0.0
    %135 = vmatpush1.msra.mxu0 0.0
    %136 = vmatprep.subr.mxu0 0.0
    %137 = vmatpush1.msra.mxu0 0.0
    %138 = vmatprep.mubr.f32.mxu0 0.0
    %139 = vmatmul.mubr.f32.gmra.mrb[0].mxu0 %v72
    %v140 = vpop.f32.mrb[0].mxu0
    %v141 = vadd.f32 %v68, %v140
    %v142 = vpop.f32.mrb[0].mxu0
    %143 = vdwg.mxu0
    %v144 = vmax.f32 %v141, 0.0
    %v145 = vld [vmem:[#allocation7] sm:$0xff]
    %v146 = vld [vmem:[#allocation7 + $0x8] sm:$0xff]
    %v147 = vld [vmem:[#allocation7 + $0x10] sm:$0xff]
    %v148 = vld [vmem:[#allocation7 + $0x18] sm:$0xff]
    %v149 = vld [vmem:[%s4] sm:$0x1]
    %v151 = vlaneseq
    %v152 = vshrl.u32 %v151, 7
    %v153 = vsub.s32 0, %v152
    %v154 = vrot.slane %v149, %v153
    %vm156 = vcmask 261120
    %v158 = vsel %vm156, %v144, 0
    %160 = vmatprep.subr.mxu0 0.0
    %161 = vmatpush1.msra.mxu0 %v145
    %162 = vmatprep.subr.mxu0 0.0
    %163 = vmatpush1.msra.mxu0 %v146
    %164 = vmatprep.subr.mxu0 0.0
    %165 = vmatpush1.msra.mxu0 %v147
    %166 = vmatprep.subr.mxu0 0.0
    %167 = vmatpush1.msra.mxu0 %v148
    %168 = vmatprep.subr.mxu0 0.0
    %169 = vmatpush1.msra.mxu0 0.0
    %170 = vmatprep.subr.mxu0 0.0
    %171 = vmatpush1.msra.mxu0 0.0
    %172 = vmatprep.subr.mxu0 0.0
    %173 = vmatpush1.msra.mxu0 0.0
    %174 = vmatprep.subr.mxu0 0.0
    %175 = vmatpush1.msra.mxu0 0.0
    %176 = vmatprep.subr.mxu0 0.0
    %177 = vmatpush1.msra.mxu0 0.0
    %178 = vmatprep.subr.mxu0 0.0
    %179 = vmatpush1.msra.mxu0 0.0
    %180 = vmatprep.subr.mxu0 0.0
    %181 = vmatpush1.msra.mxu0 0.0
    %182 = vmatprep.subr.mxu0 0.0
    %183 = vmatpush1.msra.mxu0 0.0
    %184 = vmatprep.subr.mxu0 0.0
    %185 = vmatpush1.msra.mxu0 0.0
    %186 = vmatprep.subr.mxu0 0.0
    %187 = vmatpush1.msra.mxu0 0.0
    %188 = vmatprep.subr.mxu0 0.0
    %189 = vmatpush1.msra.mxu0 0.0
    %190 = vmatprep.subr.mxu0 0.0
    %191 = vmatpush1.msra.mxu0 0.0
    %192 = vmatprep.subr.mxu0 0.0
    %193 = vmatpush1.msra.mxu0 0.0
    %194 = vmatprep.subr.mxu0 0.0
    %195 = vmatpush1.msra.mxu0 0.0
    %196 = vmatprep.subr.mxu0 0.0
    %197 = vmatpush1.msra.mxu0 0.0
    %198 = vmatprep.subr.mxu0 0.0
    %199 = vmatpush1.msra.mxu0 0.0
    %200 = vmatprep.subr.mxu0 0.0
    %201 = vmatpush1.msra.mxu0 0.0
    %202 = vmatprep.subr.mxu0 0.0
    %203 = vmatpush1.msra.mxu0 0.0
    %204 = vmatprep.subr.mxu0 0.0
    %205 = vmatpush1.msra.mxu0 0.0
    %206 = vmatprep.subr.mxu0 0.0
    %207 = vmatpush1.msra.mxu0 0.0
    %208 = vmatprep.subr.mxu0 0.0
    %209 = vmatpush1.msra.mxu0 0.0
    %210 = vmatprep.subr.mxu0 0.0
    %211 = vmatpush1.msra.mxu0 0.0
    %212 = vmatprep.subr.mxu0 0.0
    %213 = vmatpush1.msra.mxu0 0.0
    %214 = vmatprep.subr.mxu0 0.0
    %215 = vmatpush1.msra.mxu0 0.0
    %216 = vmatprep.subr.mxu0 0.0
    %217 = vmatpush1.msra.mxu0 0.0
    %218 = vmatprep.subr.mxu0 0.0
    %219 = vmatpush1.msra.mxu0 0.0
    %220 = vmatprep.subr.mxu0 0.0
    %221 = vmatpush1.msra.mxu0 0.0
    %222 = vmatprep.subr.mxu0 0.0
    %223 = vmatpush1.msra.mxu0 0.0
    %224 = vmatprep.mubr.f32.mxu0 0.0
    %225 = vmatmul.mubr.f32.gmra.mrb[0].mxu0 %v158
    %v226 = vpop.f32.mrb[0].mxu0
    %v227 = vadd.f32 %v154, %v226
    %v228 = vpop.f32.mrb[0].mxu0
    %229 = vdwg.mxu0
    %v230 = vld [vmem:[%s5] sm:$0x1]
    %v232 = vlaneseq
    %v233 = vshrl.u32 %v232, 7
    %v234 = vsub.s32 0, %v233
    %v235 = vrot.slane %v230, %v234
    %v237 = vmax.f32 %v227, %v235
    %238 = vst [vmem:[#allocation8] sm:$0xff] %v237
    // Predicated region
    $region38: #{tpu_custom_call.1} parent=1 // pred_check
      _
    $region39: #{tpu_custom_call.1} parent=1 // pred_check_branch
      %240 = sbr.rel (0) target = $region41
    $region40: #{tpu_custom_call.1} parent=1 // pred_region
      %s242 = ssub.s32 128, 128
      %243 = vsyncadd [#allocation4], %s242
      %s245 = sshll.u32 [#allocation8], 4
      %s246 = int_to_ptr.vmem [resolvable:$true] %s245
      %248 = dma.vmem_to_hbm [thread:$0]  %s246, 128, %s6, [#allocation4]
    $region41: #{tpu_custom_call.1} parent=1 // pred_fallthru
      _
    // Predicated region
    $region42: #{tpu_custom_call.1} parent=1 // pred_check
      _
    $region43: #{tpu_custom_call.1} parent=1 // pred_check_branch
      %250 = sbr.rel (0) target = $region45
    $region44: #{tpu_custom_call.1} parent=1 // pred_region
      %251 = dma.done [#allocation4], 128
    $region45: #{tpu_custom_call.1} parent=1 // pred_fallthru
      _
    %252 = vsyncpa [#allocation3], 1
    %253 = vsyncpa [#allocation6], 1
    %254 = vsyncpa [#allocation4], 1

</llo_original>
